<compile_context>
chip_gen: v6e
topology: v6e:2x2x1
jax: 0.10.0
libtpu: 0.0.40
codegen_flags: <defaults>
</compile_context>

<pallas_src>
import functools

import jax
import jax.numpy as jnp
from jax.experimental import pallas as pl
from jax.experimental.pallas import tpu as pltpu


def _round_up(x: int, m: int) -> int:
    return ((x + m - 1) // m) * m


def _vmem_capacity_bytes() -> int:
    try:
        return int(pltpu.get_tpu_info().vmem_capacity_bytes)
    except Exception:
        return 64 << 20  # conservative default (v7x per-TC VMEM)


# ----------------------------- kernels --------------------------------------


def _kernel_single_k(x_ref, w_ref, b_ref, o_ref, *, use_act: bool):
    # Whole contraction in one tile: dot + bias (+ReLU) + store, 2-D grid.
    out = jnp.dot(x_ref[...], w_ref[...], preferred_element_type=jnp.float32)
    out = out + b_ref[...]
    if use_act:
        out = jnp.maximum(out, 0.0)
    o_ref[...] = out.astype(o_ref.dtype)


def _kernel_multi_k_f32out(x_ref, w_ref, b_ref, o_ref, *, use_act: bool):
    # f32 output: accumulate directly into the VMEM-resident output tile
    # (output index_map ignores k), no scratch needed.
    k = pl.program_id(2)

    @pl.when(k == 0)
    def _init():
        o_ref[...] = jnp.zeros_like(o_ref)

    o_ref[...] += jnp.dot(
        x_ref[...], w_ref[...], preferred_element_type=jnp.float32
    )

    @pl.when(k == pl.num_programs(2) - 1)
    def _finalize():
        out = o_ref[...] + b_ref[...]
        if use_act:
            out = jnp.maximum(out, 0.0)
        o_ref[...] = out


def _kernel_multi_k_acc(x_ref, w_ref, b_ref, o_ref, acc_ref, *, use_act: bool):
    # Narrow output dtype: keep an f32 scratch accumulator.
    k = pl.program_id(2)

    @pl.when(k == 0)
    def _init():
        acc_ref[...] = jnp.zeros_like(acc_ref)

    acc_ref[...] += jnp.dot(
        x_ref[...], w_ref[...], preferred_element_type=jnp.float32
    )

    @pl.when(k == pl.num_programs(2) - 1)
    def _finalize():
        out = acc_ref[...] + b_ref[...]
        if use_act:
            out = jnp.maximum(out, 0.0)
        o_ref[...] = out.astype(o_ref.dtype)


# ----------------------------- wrapper ---------------------------------------


def _prep_2d(arr, rows_p, cols_p, dtype):
    """Cast/pad only when actually required (avoids extra HBM round trips)."""
    r, c = arr.shape
    needs_pad = (r != rows_p) or (c != cols_p)
    needs_cast = arr.dtype != dtype
    if not needs_pad and not needs_cast:
        return arr
    if needs_pad:
        return jnp.zeros((rows_p, cols_p), dtype).at[:r, :c].set(arr.astype(dtype))
    return arr.astype(dtype)


def encoder_forward(x, w_t, b, *, use_act=True, tm=None, tn=None, tk=None,
                    compute_dtype=jnp.bfloat16):
    """Encoder forward: x:(B,in_dim), w_t:(in_dim,out_dim), b:(out_dim,) -> (B,out_dim).

    For best throughput pass `w_t`/`b` already converted to `compute_dtype` /
    f32 (done once at model-build time); the wrapper then issues no extra copies.
    """
    B, in_dim = x.shape
    in_dim_w, out_dim = w_t.shape
    assert in_dim == in_dim_w
    out_dtype = x.dtype

    # --- per-generation tile caps (VMEM 128 MiB on v5e/v6e, 64 MiB on v7x) ----
    vmem_phys = _vmem_capacity_bytes()
    if vmem_phys >= (96 << 20):            # v5e / v6e
        tm_cap, tn_cap, tk_cap = 512, 512, 1024
    else:                                   # v7x (64 MiB per TensorCore)
        tm_cap, tn_cap, tk_cap = 256, 512, 512

    # --- tile sizes: round user values to (8,128) multiples, else use table ---
    if tm is None:
        tm = min(_round_up(B, 8), tm_cap)
    else:
        tm = max(8, _round_up(int(tm), 8))
    if tn is None:
        tn = min(_round_up(out_dim, 128), tn_cap)
    else:
        tn = max(128, _round_up(int(tn), 128))
    if tk is None:
        tk = min(_round_up(in_dim, 128), tk_cap)
    else:
        tk = max(128, _round_up(int(tk), 128))

    Bp = _round_up(B, tm)
    Np = _round_up(out_dim, tn)
    Kp = _round_up(in_dim, tk)
    k_steps = Kp // tk

    # --- operand prep (no-op when already aligned & in compute dtype) ---------
    xp = _prep_2d(x, Bp, Kp, compute_dtype)
    wp = _prep_2d(w_t, Kp, Np, compute_dtype)
    if b.shape == (Np,) and b.dtype == jnp.float32:
        bp = b.reshape(1, Np)
    else:
        bp = jnp.zeros((1, Np), jnp.float32).at[0, :out_dim].set(
            b.astype(jnp.float32))

    # --- VMEM budget: actual double-buffered tile bytes + ~25% headroom -------
    cdt = jnp.dtype(compute_dtype).itemsize
    odt = jnp.dtype(out_dtype).itemsize
    use_scratch = (k_steps > 1) and (out_dtype != jnp.float32)
    tile_bytes = (2 * (tm * tk + tk * tn) * cdt      # x / W double buffers
                  + 2 * tm * tn * odt                # output double buffer
                  + 2 * tn * 4                       # bias double buffer
                  + (tm * tn * 4 if use_scratch else 0))
    vmem_limit = int(min(vmem_phys * 3 // 4,
                         max(16 << 20, tile_bytes * 5 // 4 + (1 << 20))))

    cost = pl.CostEstimate(
        flops=2 * Bp * Kp * Np,
        transcendentals=0,
        bytes_accessed=(xp.size * cdt + wp.size * cdt + bp.size * 4
                        + Bp * Np * odt),
    )

    if k_steps == 1:
        # ---------- fast path: single K step, 2-D grid, no accumulator -------
        kernel = functools.partial(_kernel_single_k, use_act=use_act)
        out_padded = pl.pallas_call(
            kernel,
            out_shape=jax.ShapeDtypeStruct((Bp, Np), out_dtype),
            grid_spec=pltpu.PrefetchScalarGridSpec(
                num_scalar_prefetch=0,
                grid=(Bp // tm, Np // tn),
                in_specs=[
                    pl.BlockSpec((tm, tk), lambda i, j: (i, 0)),
                    pl.BlockSpec((tk, tn), lambda i, j: (0, j)),
                    pl.BlockSpec((1, tn), lambda i, j: (0, j)),
                ],
                out_specs=pl.BlockSpec((tm, tn), lambda i, j: (i, j)),
            ),
            compiler_params=pltpu.CompilerParams(
                dimension_semantics=("parallel", "parallel"),
                vmem_limit_bytes=vmem_limit,
            ),
            cost_estimate=cost,
        )(xp, wp, bp)
    else:
        # ---------- multi-K path: 3-D grid, K innermost reduction ------------
        in_specs = [
            pl.BlockSpec((tm, tk), lambda i, j, k: (i, k)),
            pl.BlockSpec((tk, tn), lambda i, j, k: (k, j)),
            pl.BlockSpec((1, tn), lambda i, j, k: (0, j)),
        ]
        out_spec = pl.BlockSpec((tm, tn), lambda i, j, k: (i, j))
        if use_scratch:
            kernel = functools.partial(_kernel_multi_k_acc, use_act=use_act)
            scratch = [pltpu.VMEM((tm, tn), jnp.float32)]
        else:
            kernel = functools.partial(_kernel_multi_k_f32out, use_act=use_act)
            scratch = []
        out_padded = pl.pallas_call(
            kernel,
            out_shape=jax.ShapeDtypeStruct((Bp, Np), out_dtype),
            grid_spec=pltpu.PrefetchScalarGridSpec(
                num_scalar_prefetch=0,
                grid=(Bp // tm, Np // tn, k_steps),
                in_specs=in_specs,
                out_specs=out_spec,
                scratch_shapes=scratch,
            ),
            compiler_params=pltpu.CompilerParams(
                dimension_semantics=("parallel", "parallel", "arbitrary"),
                vmem_limit_bytes=vmem_limit,
            ),
            cost_estimate=cost,
        )(xp, wp, bp)

    if (Bp, Np) != (B, out_dim):
        out_padded = out_padded[:B, :out_dim]
    return out_padded


if __name__ == "__main__":
    key = jax.random.PRNGKey(0)
    kx, kw, kb, kx2, kw2, kb2 = jax.random.split(key, 6)

    # ---- Test 1/2: small encoder, single-K fast path, with and without ReLU -
    B, in_dim, out_dim = 8, 32, 64
    x = jax.random.normal(kx, (B, in_dim), dtype=jnp.float32)
    bound = 1.0 / jnp.sqrt(jnp.float32(in_dim))
    w_t = jax.random.uniform(kw, (in_dim, out_dim), jnp.float32, -bound, bound)
    b = jax.random.uniform(kb, (out_dim,), jnp.float32, -bound, bound)
    # Pre-cast static weights once (outside the per-call path).
    w_t_bf16 = w_t.astype(jnp.bfloat16)

    y = jax.block_until_ready(encoder_forward(x, w_t_bf16, b, use_act=True))
    y_ref = jnp.maximum(x @ w_t + b, 0.0)
    assert y.shape == (B, out_dim)
    assert jnp.allclose(y, y_ref, atol=2e-2, rtol=2e-2)

    y2 = jax.block_until_ready(encoder_forward(x, w_t_bf16, b, use_act=False))
    y2_ref = x @ w_t + b
    assert jnp.allclose(y2, y2_ref, atol=2e-2, rtol=2e-2)

    # ---- Test 3: forced multi-K path (tk=128, in_dim=256), f32-output accumulate
    B3, in3, out3 = 16, 256, 128
    x3 = jax.random.normal(kx2, (B3, in3), dtype=jnp.float32)
    bound3 = 1.0 / jnp.sqrt(jnp.float32(in3))
    w3 = jax.random.uniform(kw2, (in3, out3), jnp.float32, -bound3, bound3)
    b3 = jax.random.uniform(kb2, (out3,), jnp.float32, -bound3, bound3)
    y3 = jax.block_until_ready(
        encoder_forward(x3, w3.astype(jnp.bfloat16), b3, use_act=True, tk=128))
    y3_ref = jnp.maximum(x3 @ w3 + b3, 0.0)
    assert jnp.allclose(y3, y3_ref, atol=3e-2, rtol=3e-2)

    # ---- Test 4: multi-K path with bf16 output (scratch-accumulator variant) -
    x4 = x3.astype(jnp.bfloat16)
    y4 = jax.block_until_ready(
        encoder_forward(x4, w3.astype(jnp.bfloat16), b3, use_act=True, tk=128))
    assert y4.dtype == jnp.bfloat16
    assert jnp.allclose(y4.astype(jnp.float32), y3_ref, atol=8e-2, rtol=8e-2)

    print("KERNEL_OK")
</pallas_src>

<mosaic_0001>
module attributes {stable_mosaic.version = 11 : i64} {
  func.func @_kernel_single_k(%arg0: i32, %arg1: i32, %arg2: memref<8x128xbf16, #tpu.memory_space<vmem>>, %arg3: memref<128x128xbf16, #tpu.memory_space<vmem>>, %arg4: memref<1x128xf32, #tpu.memory_space<vmem>>, %arg5: memref<8x128xf32, #tpu.memory_space<vmem>>) attributes {dimension_semantics = [#tpu.dimension_semantics<parallel>, #tpu.dimension_semantics<parallel>], iteration_bounds = array<i64: 1, 1>, scalar_prefetch = 0 : i64, scratch_operands = 0 : i64, tpu.core_type = #tpu.core_type<tc>, window_params = [{transform_indices = @transform_0, window_bounds = array<i64: 8, 128>}, {transform_indices = @transform_1, window_bounds = array<i64: 128, 128>}, {transform_indices = @transform_2, window_bounds = array<i64: 1, 128>}, {transform_indices = @transform_3, window_bounds = array<i64: 8, 128>}]} {
    %c0 = arith.constant 0 : index
    %c0_0 = arith.constant 0 : index
    %0 = vector.load %arg2[%c0, %c0_0] : memref<8x128xbf16, #tpu.memory_space<vmem>>, vector<8x128xbf16>
    %c0_1 = arith.constant 0 : index
    %c0_2 = arith.constant 0 : index
    %1 = vector.load %arg3[%c0_1, %c0_2] : memref<128x128xbf16, #tpu.memory_space<vmem>>, vector<128x128xbf16>
    %cst = arith.constant dense<0.000000e+00> : vector<8x128xf32>
    %2 = tpu.matmul %0, %1, %cst {dimension_numbers = #tpu.dot_dimension_numbers<[1], [0], [0], [1], [0, 0, 1, 1], [], []>} : vector<8x128xbf16>, vector<128x128xbf16>, vector<8x128xf32> -> vector<8x128xf32>
    %c0_3 = arith.constant 0 : index
    %c0_4 = arith.constant 0 : index
    %3 = vector.load %arg4[%c0_3, %c0_4] : memref<1x128xf32, #tpu.memory_space<vmem>>, vector<1x128xf32>
    %4 = vector.broadcast %3 : vector<1x128xf32> to vector<8x128xf32>
    %5 = arith.addf %2, %4 : vector<8x128xf32>
    %cst_5 = arith.constant 0.000000e+00 : f32
    %6 = vector.broadcast %cst_5 : f32 to vector<8x128xf32>
    %7 = arith.maximumf %5, %6 : vector<8x128xf32>
    %c0_6 = arith.constant 0 : index
    %c0_7 = arith.constant 0 : index
    %8 = vector.load %arg5[%c0_6, %c0_7] : memref<8x128xf32, #tpu.memory_space<vmem>>, vector<8x128xf32>
    tpu.vector_store %arg5[%c0_6, %c0_7], %7 {strides = array<i32>} : memref<8x128xf32, #tpu.memory_space<vmem>>, vector<8x128xf32>,
    return
  }
  func.func @transform_0(%arg0: i32, %arg1: i32) -> (i32, i32) {
    %c0_i32 = arith.constant 0 : i32
    %c0_i32_0 = arith.constant 0 : i32
    return %arg0, %c0_i32 : i32, i32
  }
  func.func @transform_1(%arg0: i32, %arg1: i32) -> (i32, i32) {
    %c0_i32 = arith.constant 0 : i32
    %c0_i32_0 = arith.constant 0 : i32
    return %c0_i32, %arg1 : i32, i32
  }
  func.func @transform_2(%arg0: i32, %arg1: i32) -> (i32, i32) {
    %c0_i32 = arith.constant 0 : i32
    %c0_i32_0 = arith.constant 0 : i32
    return %c0_i32, %arg1 : i32, i32
  }
  func.func @transform_3(%arg0: i32, %arg1: i32) -> (i32, i32) {
    %c0_i32 = arith.constant 0 : i32
    return %arg0, %arg1 : i32, i32
  }
}

</mosaic_0001>

<llo_original>
// kernel: tpu_custom_call.1
$region0: #{tpu_custom_call.1}
  #allocation0 [shape = 'u32[]', space=smem, size = 0x4, offset = 0x4, fixed_abs, tag = 'smem constant byte address 0x4 - core index']
  #allocation1 [shape = 'u32[144,128]{1,0:T(1,128)}', space=vmem, size = 0x12000, scoped, tag = 'internal scratch']
  %s0 = inlined_call_operand.hbm [shape: bf16[8,128], index: 0, kind: input, shape index: {}]
  %s1 = inlined_call_operand.hbm [shape: bf16[128,128], index: 1, kind: input, shape index: {}]
  %s2 = inlined_call_operand.vmem [shape: f32[1,128], index: 2, kind: input, shape index: {}]
  %s3 = inlined_call_operand.hbm [shape: f32[8,128], index: 3, kind: output, shape index: {}]
  %s4 = sld [smem:[#allocation0]]
  $region30: #{tpu_custom_call.1} parent=0
    _
  %s6 = ssub.s32 1, %s4
  %s7 = scalar_select 0, %s6, %s4
  $region1: #{tpu_custom_call.1} parent=0
    #allocation2 [shape = 'u8[2048]{0}', space=vmem, size = 0x800, scoped, tag = 'input window, operand 0, single buffered']
    #allocation3 [shape = 's32[1]{0}', space=sflag, size = 0x4, scoped, tag = 'scoped memory for tpu_custom_call.1']
    #allocation4 [shape = 's32[1]{0}', space=sflag, size = 0x4, scoped, tag = 'scoped memory for tpu_custom_call.1']
    #allocation5 [shape = 'u8[32768]{0}', space=vmem, size = 0x8000, scoped, tag = 'input window, operand 1, single buffered']
    #allocation6 [shape = 's32[1]{0}', space=sflag, size = 0x4, scoped, tag = 'scoped memory for tpu_custom_call.1']
    #allocation7 [shape = 'u8[4096]{0}', space=vmem, size = 0x1000, scoped, tag = 'output window, operand 0, single buffered']
    %8 = vsyncpa [#allocation3], 0
    %9 = vsyncpa [#allocation6], 0
    %10 = vsyncpa [#allocation4], 0
    // Predicated region
    $region2: #{tpu_custom_call.1} parent=1 // pred_check
      _
    $region3: #{tpu_custom_call.1} parent=1 // pred_check_branch
      %12 = sbr.rel (0) target = $region5
    $region4: #{tpu_custom_call.1} parent=1 // pred_region
      %s14 = ssub.s32 64, 64
      %15 = vsyncadd [#allocation3], %s14
      %s17 = sshll.u32 [#allocation2], 4
      %s18 = int_to_ptr.vmem [resolvable:$true] %s17
      %20 = dma.hbm_to_vmem [thread:$0]  %s0, 64, %s18, [#allocation3]
    $region5: #{tpu_custom_call.1} parent=1 // pred_fallthru
      _
    // Predicated region
    $region6: #{tpu_custom_call.1} parent=1 // pred_check
      _
    $region7: #{tpu_custom_call.1} parent=1 // pred_check_branch
      %22 = sbr.rel (0) target = $region9
    $region8: #{tpu_custom_call.1} parent=1 // pred_region
      %s24 = ssub.s32 1024, 1024
      %25 = vsyncadd [#allocation6], %s24
      %s26 = sshll.u32 [#allocation5], 4
      %s27 = int_to_ptr.vmem [resolvable:$true] %s26
      %32 = dma.hbm_to_vmem [thread:$0]  %s1, 1024, %s27, [#allocation6], 64, 64, 4
    $region9: #{tpu_custom_call.1} parent=1 // pred_fallthru
      _
    // Predicated region
    $region10: #{tpu_custom_call.1} parent=1 // pred_check
      _
    $region11: #{tpu_custom_call.1} parent=1 // pred_check_branch
      %34 = sbr.rel (0) target = $region13
    $region12: #{tpu_custom_call.1} parent=1 // pred_region
      _
    $region13: #{tpu_custom_call.1} parent=1 // pred_fallthru
      _
    // Predicated region
    $region14: #{tpu_custom_call.1} parent=1 // pred_check
      _
    $region15: #{tpu_custom_call.1} parent=1 // pred_check_branch
      %36 = sbr.rel (0) target = $region17
    $region16: #{tpu_custom_call.1} parent=1 // pred_region
      %37 = dma.done [#allocation3], 64
    $region17: #{tpu_custom_call.1} parent=1 // pred_fallthru
      _
    // Predicated region
    $region18: #{tpu_custom_call.1} parent=1 // pred_check
      _
    $region19: #{tpu_custom_call.1} parent=1 // pred_check_branch
      %39 = sbr.rel (0) target = $region21
    $region20: #{tpu_custom_call.1} parent=1 // pred_region
      %40 = dma.done [#allocation6], 1024
    $region21: #{tpu_custom_call.1} parent=1 // pred_fallthru
      _
    %v42 = vld [vmem:[#allocation2] sm:$0xf]
    %v43 = vld [vmem:[#allocation5] sm:$0xf]
    %v44 = vld [vmem:[#allocation5 + $0x4] sm:$0xf]
    %v45 = vld [vmem:[#allocation5 + $0x8] sm:$0xf]
    %v46 = vld [vmem:[#allocation5 + $0xc] sm:$0xf]
    %v47 = vld [vmem:[#allocation5 + $0x10] sm:$0xf]
    %v48 = vld [vmem:[#allocation5 + $0x14] sm:$0xf]
    %v49 = vld [vmem:[#allocation5 + $0x18] sm:$0xf]
    %v50 = vld [vmem:[#allocation5 + $0x1c] sm:$0xf]
    %v51 = vld [vmem:[#allocation5 + $0x20] sm:$0xf]
    %v52 = vld [vmem:[#allocation5 + $0x24] sm:$0xf]
    %v53 = vld [vmem:[#allocation5 + $0x28] sm:$0xf]
    %v54 = vld [vmem:[#allocation5 + $0x2c] sm:$0xf]
    %v55 = vld [vmem:[#allocation5 + $0x30] sm:$0xf]
    %v56 = vld [vmem:[#allocation5 + $0x34] sm:$0xf]
    %v57 = vld [vmem:[#allocation5 + $0x38] sm:$0xf]
    %v58 = vld [vmem:[#allocation5 + $0x3c] sm:$0xf]
    %v59 = vld [vmem:[%s2] sm:$0x1]
    %v61 = vlaneseq
    %v62 = vshrl.u32 %v61, 7
    %v63 = vsub.s32 0, %v62
    %v64 = vrot.slane %v59, %v63
    %v82 = vunpack.c.l.b16 %v43
    %v83 = vunpack.c.l.b16 %v44
    %v84 = vunpack.c.l.b16 %v45
    %v85 = vunpack.c.l.b16 %v46
    %v86 = vunpack.c.l.b16 %v47
    %v87 = vunpack.c.l.b16 %v48
    %v88 = vunpack.c.l.b16 %v49
    %v89 = vunpack.c.l.b16 %v50
    %v90 = vunpack.c.l.b16 %v51
    %v91 = vunpack.c.l.b16 %v52
    %v92 = vunpack.c.l.b16 %v53
    %v93 = vunpack.c.l.b16 %v54
    %v94 = vunpack.c.l.b16 %v55
    %v95 = vunpack.c.l.b16 %v56
    %v96 = vunpack.c.l.b16 %v57
    %v97 = vunpack.c.l.b16 %v58
    %v98 = vpack.c.b16 %v83, %v82
    %v99 = vpack.c.b16 %v85, %v84
    %v100 = vpack.c.b16 %v87, %v86
    %v101 = vpack.c.b16 %v89, %v88
    %v102 = vpack.c.b16 %v91, %v90
    %v103 = vpack.c.b16 %v93, %v92
    %v104 = vpack.c.b16 %v95, %v94
    %v105 = vpack.c.b16 %v97, %v96
    %114 = vmatprep.subr.bf16.mxu0 0
    %115 = vmatpush1.bf16.msra.mxu0 %v105
    %116 = vmatprep.subr.bf16.mxu0 0
    %117 = vmatpush1.bf16.msra.mxu0 %v104
    %118 = vmatprep.subr.bf16.mxu0 0
    %119 = vmatpush1.bf16.msra.mxu0 %v103
    %120 = vmatprep.subr.bf16.mxu0 0
    %121 = vmatpush1.bf16.msra.mxu0 %v102
    %122 = vmatprep.subr.bf16.mxu0 0
    %123 = vmatpush1.bf16.msra.mxu0 %v101
    %124 = vmatprep.subr.bf16.mxu0 0
    %125 = vmatpush1.bf16.msra.mxu0 %v100
    %126 = vmatprep.subr.bf16.mxu0 0
    %127 = vmatpush1.bf16.msra.mxu0 %v99
    %128 = vmatprep.subr.bf16.mxu0 0
    %129 = vmatpush1.bf16.msra.mxu0 %v98
    %130 = vmatprep.subr.bf16.mxu0 0
    %131 = vmatpush2.bf16.msra.mxu0 0
    %132 = vmatprep.subr.bf16.mxu0 0
    %133 = vmatpush2.bf16.msra.mxu0 0
    %134 = vmatprep.subr.bf16.mxu0 0
    %135 = vmatpush2.bf16.msra.mxu0 0
    %136 = vmatprep.subr.bf16.mxu0 0
    %137 = vmatpush2.bf16.msra.mxu0 0
    %138 = vmatprep.subr.bf16.mxu0 0
    %139 = vmatpush2.bf16.msra.mxu0 0
    %140 = vmatprep.subr.bf16.mxu0 0
    %141 = vmatpush2.bf16.msra.mxu0 0
    %142 = vmatprep.subr.bf16.mxu0 0
    %143 = vmatpush2.bf16.msra.mxu0 0
    %144 = vmatprep.subr.bf16.mxu0 0
    %145 = vmatpush2.bf16.msra.mxu0 0
    %146 = vmatprep.mubr.bf16.mxu0 0
    %147 = vmatmul.mubr.bf16.gmra.mxu0 %v42
    %v148 = vpop.f32.mrf.mxu0
    %v149 = vadd.f32 %v64, %v148
    %v150 = vpop.f32.mrf.mxu0
    %v151 = vpop.f32.mrf.mxu0
    %v152 = vpop.f32.mrf.mxu0
    %153 = vdwg.mxu0
    %v154 = vmax.f32 %v149, 0.0
    %155 = vst [vmem:[#allocation7] sm:$0xff] %v154
    // Predicated region
    $region22: #{tpu_custom_call.1} parent=1 // pred_check
      _
    $region23: #{tpu_custom_call.1} parent=1 // pred_check_branch
      %157 = sbr.rel (0) target = $region25
    $region24: #{tpu_custom_call.1} parent=1 // pred_region
      %s159 = ssub.s32 128, 128
      %160 = vsyncadd [#allocation4], %s159
      %s162 = sshll.u32 [#allocation7], 4
      %s163 = int_to_ptr.vmem [resolvable:$true] %s162
      %165 = dma.vmem_to_hbm [thread:$0]  %s163, 128, %s3, [#allocation4]
    $region25: #{tpu_custom_call.1} parent=1 // pred_fallthru
      _
    // Predicated region
    $region26: #{tpu_custom_call.1} parent=1 // pred_check
      _
    $region27: #{tpu_custom_call.1} parent=1 // pred_check_branch
      %167 = sbr.rel (0) target = $region29
    $region28: #{tpu_custom_call.1} parent=1 // pred_region
      %168 = dma.done [#allocation4], 128
    $region29: #{tpu_custom_call.1} parent=1 // pred_fallthru
      _
    %169 = vsyncpa [#allocation3], 1
    %170 = vsyncpa [#allocation6], 1
    %171 = vsyncpa [#allocation4], 1

</llo_original>
